<compile_context>
chip_gen: v5e
topology: v5e:2x2
jax: 0.10.0
libtpu: 0.0.40
codegen_flags: <defaults>
</compile_context>

<pallas_src>
import functools

import jax
import jax.numpy as jnp
from jax.experimental import pallas as pl
from jax.experimental.pallas import tpu as pltpu


def _round_up(x, m):
    return (x + m - 1) // m * m


# ------------------------------------------------------------------ Pallas kernel
def _weight_by_kq_kernel(*refs, num_keys, channels):
    # refs = (q_ref, key_ref_0 .. key_ref_{K-1}, o_ref)
    #   q_ref / key_ref_k : (NB, C, PT)   C on sublanes, PT (spatial tile) on lanes
    #   o_ref             : (NB, K, PT)
    q_ref = refs[0]
    key_refs = refs[1:1 + num_keys]
    o_ref = refs[1 + num_keys]

    q = q_ref[...].astype(jnp.float32)                       # (NB, C, PT), f32 accumulation

    def chan_dot(key_ref):
        k = key_ref[...].astype(jnp.float32)                 # (NB, C, PT)
        if channels <= 8:
            # Unrolled VPU multiply-adds: avoids a cross-sublane (XLU) reduce for tiny C.
            acc = q[:, 0, :] * k[:, 0, :]
            for c in range(1, channels):
                acc = acc + q[:, c, :] * k[:, c, :]
            return acc                                       # (NB, PT)
        return jnp.sum(q * k, axis=1)                        # (NB, PT)

    # Per-key channel reduction: w_k[n, p] = sum_c q[n, c, p] * key_k[n, c, p]
    rows = [chan_dot(kr) for kr in key_refs]                 # K x (NB, PT)

    # Numerically-stable softmax over the K keys, computed elementwise over the list of
    # rows (VPU maximum/add trees; no sublane concat + cross-sublane reductions).
    m = rows[0]
    for r in rows[1:]:
        m = jnp.maximum(m, r)
    es = [jnp.exp(r - m) for r in rows]                      # EUP
    s = es[0]
    for e in es[1:]:
        s = s + e
    # Exact reciprocal on the EUP slot (approx=True would break the 1e-5 sum-to-1 check).
    inv = pl.reciprocal(s, approx=False)

    # Assemble once and do a single full-width, lane-dense block store.
    out = jnp.stack([e * inv for e in es], axis=1)           # (NB, K, PT)
    o_ref[...] = out.astype(o_ref.dtype)


# ------------------------------------------------------------------ tile selection
def _pick_tiles(N, C, K, P, itemsize, vmem_budget_bytes):
    """Pick (block_n, block_p) so one grid step's double-buffered resident VMEM stays
    within a conservative budget (fits v5e's 16 MiB scoped default and v7x's 64 MiB
    physical VMEM). Sublane padding (2nd-to-last block dim rounded up to 8) included."""
    c_pad = _round_up(C, 8)
    k_pad = _round_up(K, 8)
    # Bytes per batch row per spatial element: (1+K) double-buffered inputs + output.
    per_np = 2 * ((1 + K) * c_pad + k_pad) * itemsize
    if per_np * P <= vmem_budget_bytes:
        # Full-P blocks: one large contiguous DMA per operand per step; take as many
        # batch rows per step as fit the budget.
        block_n = max(1, min(N, vmem_budget_bytes // (per_np * P)))
        return block_n, P
    # Otherwise tile the spatial axis in lane-aligned (multiple of 128) chunks.
    block_p = max(128, (vmem_budget_bytes // per_np) // 128 * 128)
    return 1, min(block_p, P)


# ------------------------------------------------------------------ wrapper
def weight_by_key_query(q, key_list, *, vmem_budget_bytes=8 << 20, vmem_limit_bytes=None):
    """q: (N, C, H, W); key_list: list of K tensors, each (N, C, H, W).

    Returns softmax-over-keys weights of shape (N, K, H, W) (matches the PyTorch module).
    On v6e, pass vmem_budget_bytes/vmem_limit_bytes ~ 64<<20 to run larger tiles per step.
    """
    N, C, H, W = q.shape
    K = len(key_list)
    P = H * W
    itemsize = jnp.dtype(q.dtype).itemsize

    # Free (contiguous) reshapes: spatial onto the lane axis, channels onto sublanes.
    q2 = q.reshape(N, C, P)
    keys2 = [k.reshape(N, C, P) for k in key_list]

    block_n, block_p = _pick_tiles(N, C, K, P, itemsize, vmem_budget_bytes)
    grid = (pl.cdiv(N, block_n), pl.cdiv(P, block_p))

    in_spec = pl.BlockSpec((block_n, C, block_p), lambda n, p: (n, 0, p))
    out_spec = pl.BlockSpec((block_n, K, block_p), lambda n, p: (n, 0, p))

    # Advisory cost estimate: lets XLA overlap neighbors around this HBM-bound call.
    cost = pl.CostEstimate(
        flops=2 * C * K * N * P + 4 * K * N * P,
        transcendentals=K * N * P + N * P,
        bytes_accessed=(1 + K) * N * C * P * itemsize + N * K * P * itemsize,
    )

    kernel = functools.partial(_weight_by_kq_kernel, num_keys=K, channels=C)
    out = pl.pallas_call(
        kernel,
        out_shape=jax.ShapeDtypeStruct((N, K, P), q.dtype),
        grid=grid,
        in_specs=[in_spec] * (1 + K),
        out_specs=out_spec,
        compiler_params=pltpu.CompilerParams(
            dimension_semantics=("parallel", "arbitrary"),   # batch across TCs on v7x
            vmem_limit_bytes=vmem_limit_bytes),
        cost_estimate=cost,
    )(q2, *keys2)
    return out.reshape(N, K, H, W)


# ------------------------------------------------------------------ plain-JAX reference
def weight_by_key_query_ref(q, key_list):
    w = jnp.stack([jnp.sum(q * k, axis=1) for k in key_list], axis=1)  # (N, K, H, W)
    return jax.nn.softmax(w, axis=1)


# ------------------------------------------------------------------ main
if __name__ == "__main__":
    N, C, H, W, K = 2, 4, 16, 16, 4   # P = H*W = 256 -> two full 128-lane vregs per row

    root = jax.random.PRNGKey(0)
    ks = jax.random.split(root, K + 1)
    q = jax.random.normal(ks[0], (N, C, H, W), jnp.float32)
    key_list = [jax.random.normal(ks[i + 1], (N, C, H, W), jnp.float32) for i in range(K)]

    fwd = jax.jit(weight_by_key_query)
    out = fwd(q, key_list)
    jax.block_until_ready(out)

    ref = weight_by_key_query_ref(q, key_list)
    assert out.shape == (N, K, H, W)
    assert bool(jnp.all(jnp.isfinite(out)))
    assert bool(jnp.allclose(jnp.sum(out, axis=1), 1.0, atol=1e-5))
    assert bool(jnp.allclose(out, ref, atol=1e-5, rtol=1e-5))

    print("KERNEL_OK")
</pallas_src>

<mosaic_0001>
module attributes {stable_mosaic.version = 11 : i64} {
  func.func @_weight_by_kq_kernel(%arg0: i32, %arg1: i32, %arg2: memref<2x4x256xf32, #tpu.memory_space<vmem>>, %arg3: memref<2x4x256xf32, #tpu.memory_space<vmem>>, %arg4: memref<2x4x256xf32, #tpu.memory_space<vmem>>, %arg5: memref<2x4x256xf32, #tpu.memory_space<vmem>>, %arg6: memref<2x4x256xf32, #tpu.memory_space<vmem>>, %arg7: memref<2x4x256xf32, #tpu.memory_space<vmem>>) attributes {dimension_semantics = [#tpu.dimension_semantics<parallel>, #tpu.dimension_semantics<arbitrary>], iteration_bounds = array<i64: 1, 1>, scalar_prefetch = 0 : i64, scratch_operands = 0 : i64, tpu.core_type = #tpu.core_type<tc>, window_params = [{transform_indices = @transform_0, window_bounds = array<i64: 2, 4, 256>}, {transform_indices = @transform_1, window_bounds = array<i64: 2, 4, 256>}, {transform_indices = @transform_2, window_bounds = array<i64: 2, 4, 256>}, {transform_indices = @transform_3, window_bounds = array<i64: 2, 4, 256>}, {transform_indices = @transform_4, window_bounds = array<i64: 2, 4, 256>}, {transform_indices = @transform_5, window_bounds = array<i64: 2, 4, 256>}]} {
    %c0 = arith.constant 0 : index
    %c0_0 = arith.constant 0 : index
    %c0_1 = arith.constant 0 : index
    %0 = vector.load %arg2[%c0, %c0_0, %c0_1] : memref<2x4x256xf32, #tpu.memory_space<vmem>>, vector<2x4x256xf32>
    %c0_2 = arith.constant 0 : index
    %c0_3 = arith.constant 0 : index
    %c0_4 = arith.constant 0 : index
    %1 = vector.load %arg3[%c0_2, %c0_3, %c0_4] : memref<2x4x256xf32, #tpu.memory_space<vmem>>, vector<2x4x256xf32>
    %2 = vector.extract_strided_slice %0 {offsets = [0, 0, 0], sizes = [2, 1, 256], strides = [1, 1, 1]} : vector<2x4x256xf32> to vector<2x1x256xf32>
    %3 = vector.shape_cast %2 : vector<2x1x256xf32> to vector<2x256xf32>
    %4 = vector.extract_strided_slice %1 {offsets = [0, 0, 0], sizes = [2, 1, 256], strides = [1, 1, 1]} : vector<2x4x256xf32> to vector<2x1x256xf32>
    %5 = vector.shape_cast %4 : vector<2x1x256xf32> to vector<2x256xf32>
    %6 = arith.mulf %3, %5 : vector<2x256xf32>
    %7 = vector.extract_strided_slice %0 {offsets = [0, 1, 0], sizes = [2, 1, 256], strides = [1, 1, 1]} : vector<2x4x256xf32> to vector<2x1x256xf32>
    %8 = vector.shape_cast %7 : vector<2x1x256xf32> to vector<2x256xf32>
    %9 = vector.extract_strided_slice %1 {offsets = [0, 1, 0], sizes = [2, 1, 256], strides = [1, 1, 1]} : vector<2x4x256xf32> to vector<2x1x256xf32>
    %10 = vector.shape_cast %9 : vector<2x1x256xf32> to vector<2x256xf32>
    %11 = arith.mulf %8, %10 : vector<2x256xf32>
    %12 = arith.addf %6, %11 : vector<2x256xf32>
    %13 = vector.extract_strided_slice %0 {offsets = [0, 2, 0], sizes = [2, 1, 256], strides = [1, 1, 1]} : vector<2x4x256xf32> to vector<2x1x256xf32>
    %14 = vector.shape_cast %13 : vector<2x1x256xf32> to vector<2x256xf32>
    %15 = vector.extract_strided_slice %1 {offsets = [0, 2, 0], sizes = [2, 1, 256], strides = [1, 1, 1]} : vector<2x4x256xf32> to vector<2x1x256xf32>
    %16 = vector.shape_cast %15 : vector<2x1x256xf32> to vector<2x256xf32>
    %17 = arith.mulf %14, %16 : vector<2x256xf32>
    %18 = arith.addf %12, %17 : vector<2x256xf32>
    %19 = vector.extract_strided_slice %0 {offsets = [0, 3, 0], sizes = [2, 1, 256], strides = [1, 1, 1]} : vector<2x4x256xf32> to vector<2x1x256xf32>
    %20 = vector.shape_cast %19 : vector<2x1x256xf32> to vector<2x256xf32>
    %21 = vector.extract_strided_slice %1 {offsets = [0, 3, 0], sizes = [2, 1, 256], strides = [1, 1, 1]} : vector<2x4x256xf32> to vector<2x1x256xf32>
    %22 = vector.shape_cast %21 : vector<2x1x256xf32> to vector<2x256xf32>
    %23 = arith.mulf %20, %22 : vector<2x256xf32>
    %24 = arith.addf %18, %23 : vector<2x256xf32>
    %c0_5 = arith.constant 0 : index
    %c0_6 = arith.constant 0 : index
    %c0_7 = arith.constant 0 : index
    %25 = vector.load %arg4[%c0_5, %c0_6, %c0_7] : memref<2x4x256xf32, #tpu.memory_space<vmem>>, vector<2x4x256xf32>
    %26 = vector.extract_strided_slice %0 {offsets = [0, 0, 0], sizes = [2, 1, 256], strides = [1, 1, 1]} : vector<2x4x256xf32> to vector<2x1x256xf32>
    %27 = vector.shape_cast %26 : vector<2x1x256xf32> to vector<2x256xf32>
    %28 = vector.extract_strided_slice %25 {offsets = [0, 0, 0], sizes = [2, 1, 256], strides = [1, 1, 1]} : vector<2x4x256xf32> to vector<2x1x256xf32>
    %29 = vector.shape_cast %28 : vector<2x1x256xf32> to vector<2x256xf32>
    %30 = arith.mulf %27, %29 : vector<2x256xf32>
    %31 = vector.extract_strided_slice %0 {offsets = [0, 1, 0], sizes = [2, 1, 256], strides = [1, 1, 1]} : vector<2x4x256xf32> to vector<2x1x256xf32>
    %32 = vector.shape_cast %31 : vector<2x1x256xf32> to vector<2x256xf32>
    %33 = vector.extract_strided_slice %25 {offsets = [0, 1, 0], sizes = [2, 1, 256], strides = [1, 1, 1]} : vector<2x4x256xf32> to vector<2x1x256xf32>
    %34 = vector.shape_cast %33 : vector<2x1x256xf32> to vector<2x256xf32>
    %35 = arith.mulf %32, %34 : vector<2x256xf32>
    %36 = arith.addf %30, %35 : vector<2x256xf32>
    %37 = vector.extract_strided_slice %0 {offsets = [0, 2, 0], sizes = [2, 1, 256], strides = [1, 1, 1]} : vector<2x4x256xf32> to vector<2x1x256xf32>
    %38 = vector.shape_cast %37 : vector<2x1x256xf32> to vector<2x256xf32>
    %39 = vector.extract_strided_slice %25 {offsets = [0, 2, 0], sizes = [2, 1, 256], strides = [1, 1, 1]} : vector<2x4x256xf32> to vector<2x1x256xf32>
    %40 = vector.shape_cast %39 : vector<2x1x256xf32> to vector<2x256xf32>
    %41 = arith.mulf %38, %40 : vector<2x256xf32>
    %42 = arith.addf %36, %41 : vector<2x256xf32>
    %43 = vector.extract_strided_slice %0 {offsets = [0, 3, 0], sizes = [2, 1, 256], strides = [1, 1, 1]} : vector<2x4x256xf32> to vector<2x1x256xf32>
    %44 = vector.shape_cast %43 : vector<2x1x256xf32> to vector<2x256xf32>
    %45 = vector.extract_strided_slice %25 {offsets = [0, 3, 0], sizes = [2, 1, 256], strides = [1, 1, 1]} : vector<2x4x256xf32> to vector<2x1x256xf32>
    %46 = vector.shape_cast %45 : vector<2x1x256xf32> to vector<2x256xf32>
    %47 = arith.mulf %44, %46 : vector<2x256xf32>
    %48 = arith.addf %42, %47 : vector<2x256xf32>
    %c0_8 = arith.constant 0 : index
    %c0_9 = arith.constant 0 : index
    %c0_10 = arith.constant 0 : index
    %49 = vector.load %arg5[%c0_8, %c0_9, %c0_10] : memref<2x4x256xf32, #tpu.memory_space<vmem>>, vector<2x4x256xf32>
    %50 = vector.extract_strided_slice %0 {offsets = [0, 0, 0], sizes = [2, 1, 256], strides = [1, 1, 1]} : vector<2x4x256xf32> to vector<2x1x256xf32>
    %51 = vector.shape_cast %50 : vector<2x1x256xf32> to vector<2x256xf32>
    %52 = vector.extract_strided_slice %49 {offsets = [0, 0, 0], sizes = [2, 1, 256], strides = [1, 1, 1]} : vector<2x4x256xf32> to vector<2x1x256xf32>
    %53 = vector.shape_cast %52 : vector<2x1x256xf32> to vector<2x256xf32>
    %54 = arith.mulf %51, %53 : vector<2x256xf32>
    %55 = vector.extract_strided_slice %0 {offsets = [0, 1, 0], sizes = [2, 1, 256], strides = [1, 1, 1]} : vector<2x4x256xf32> to vector<2x1x256xf32>
    %56 = vector.shape_cast %55 : vector<2x1x256xf32> to vector<2x256xf32>
    %57 = vector.extract_strided_slice %49 {offsets = [0, 1, 0], sizes = [2, 1, 256], strides = [1, 1, 1]} : vector<2x4x256xf32> to vector<2x1x256xf32>
    %58 = vector.shape_cast %57 : vector<2x1x256xf32> to vector<2x256xf32>
    %59 = arith.mulf %56, %58 : vector<2x256xf32>
    %60 = arith.addf %54, %59 : vector<2x256xf32>
    %61 = vector.extract_strided_slice %0 {offsets = [0, 2, 0], sizes = [2, 1, 256], strides = [1, 1, 1]} : vector<2x4x256xf32> to vector<2x1x256xf32>
    %62 = vector.shape_cast %61 : vector<2x1x256xf32> to vector<2x256xf32>
    %63 = vector.extract_strided_slice %49 {offsets = [0, 2, 0], sizes = [2, 1, 256], strides = [1, 1, 1]} : vector<2x4x256xf32> to vector<2x1x256xf32>
    %64 = vector.shape_cast %63 : vector<2x1x256xf32> to vector<2x256xf32>
    %65 = arith.mulf %62, %64 : vector<2x256xf32>
    %66 = arith.addf %60, %65 : vector<2x256xf32>
    %67 = vector.extract_strided_slice %0 {offsets = [0, 3, 0], sizes = [2, 1, 256], strides = [1, 1, 1]} : vector<2x4x256xf32> to vector<2x1x256xf32>
    %68 = vector.shape_cast %67 : vector<2x1x256xf32> to vector<2x256xf32>
    %69 = vector.extract_strided_slice %49 {offsets = [0, 3, 0], sizes = [2, 1, 256], strides = [1, 1, 1]} : vector<2x4x256xf32> to vector<2x1x256xf32>
    %70 = vector.shape_cast %69 : vector<2x1x256xf32> to vector<2x256xf32>
    %71 = arith.mulf %68, %70 : vector<2x256xf32>
    %72 = arith.addf %66, %71 : vector<2x256xf32>
    %c0_11 = arith.constant 0 : index
    %c0_12 = arith.constant 0 : index
    %c0_13 = arith.constant 0 : index
    %73 = vector.load %arg6[%c0_11, %c0_12, %c0_13] : memref<2x4x256xf32, #tpu.memory_space<vmem>>, vector<2x4x256xf32>
    %74 = vector.extract_strided_slice %0 {offsets = [0, 0, 0], sizes = [2, 1, 256], strides = [1, 1, 1]} : vector<2x4x256xf32> to vector<2x1x256xf32>
    %75 = vector.shape_cast %74 : vector<2x1x256xf32> to vector<2x256xf32>
    %76 = vector.extract_strided_slice %73 {offsets = [0, 0, 0], sizes = [2, 1, 256], strides = [1, 1, 1]} : vector<2x4x256xf32> to vector<2x1x256xf32>
    %77 = vector.shape_cast %76 : vector<2x1x256xf32> to vector<2x256xf32>
    %78 = arith.mulf %75, %77 : vector<2x256xf32>
    %79 = vector.extract_strided_slice %0 {offsets = [0, 1, 0], sizes = [2, 1, 256], strides = [1, 1, 1]} : vector<2x4x256xf32> to vector<2x1x256xf32>
    %80 = vector.shape_cast %79 : vector<2x1x256xf32> to vector<2x256xf32>
    %81 = vector.extract_strided_slice %73 {offsets = [0, 1, 0], sizes = [2, 1, 256], strides = [1, 1, 1]} : vector<2x4x256xf32> to vector<2x1x256xf32>
    %82 = vector.shape_cast %81 : vector<2x1x256xf32> to vector<2x256xf32>
    %83 = arith.mulf %80, %82 : vector<2x256xf32>
    %84 = arith.addf %78, %83 : vector<2x256xf32>
    %85 = vector.extract_strided_slice %0 {offsets = [0, 2, 0], sizes = [2, 1, 256], strides = [1, 1, 1]} : vector<2x4x256xf32> to vector<2x1x256xf32>
    %86 = vector.shape_cast %85 : vector<2x1x256xf32> to vector<2x256xf32>
    %87 = vector.extract_strided_slice %73 {offsets = [0, 2, 0], sizes = [2, 1, 256], strides = [1, 1, 1]} : vector<2x4x256xf32> to vector<2x1x256xf32>
    %88 = vector.shape_cast %87 : vector<2x1x256xf32> to vector<2x256xf32>
    %89 = arith.mulf %86, %88 : vector<2x256xf32>
    %90 = arith.addf %84, %89 : vector<2x256xf32>
    %91 = vector.extract_strided_slice %0 {offsets = [0, 3, 0], sizes = [2, 1, 256], strides = [1, 1, 1]} : vector<2x4x256xf32> to vector<2x1x256xf32>
    %92 = vector.shape_cast %91 : vector<2x1x256xf32> to vector<2x256xf32>
    %93 = vector.extract_strided_slice %73 {offsets = [0, 3, 0], sizes = [2, 1, 256], strides = [1, 1, 1]} : vector<2x4x256xf32> to vector<2x1x256xf32>
    %94 = vector.shape_cast %93 : vector<2x1x256xf32> to vector<2x256xf32>
    %95 = arith.mulf %92, %94 : vector<2x256xf32>
    %96 = arith.addf %90, %95 : vector<2x256xf32>
    %97 = arith.maximumf %24, %48 : vector<2x256xf32>
    %98 = arith.maximumf %97, %72 : vector<2x256xf32>
    %99 = arith.maximumf %98, %96 : vector<2x256xf32>
    %100 = arith.subf %24, %99 : vector<2x256xf32>
    %101 = math.exp %100 : vector<2x256xf32>
    %102 = arith.subf %48, %99 : vector<2x256xf32>
    %103 = math.exp %102 : vector<2x256xf32>
    %104 = arith.subf %72, %99 : vector<2x256xf32>
    %105 = math.exp %104 : vector<2x256xf32>
    %106 = arith.subf %96, %99 : vector<2x256xf32>
    %107 = math.exp %106 : vector<2x256xf32>
    %108 = arith.addf %101, %103 : vector<2x256xf32>
    %109 = arith.addf %108, %105 : vector<2x256xf32>
    %110 = arith.addf %109, %107 : vector<2x256xf32>
    %111 = tpu.reciprocal %110 : vector<2x256xf32> -> vector<2x256xf32>
    %112 = arith.mulf %101, %111 : vector<2x256xf32>
    %113 = arith.mulf %103, %111 : vector<2x256xf32>
    %114 = arith.mulf %105, %111 : vector<2x256xf32>
    %115 = arith.mulf %107, %111 : vector<2x256xf32>
    %116 = vector.shape_cast %112 : vector<2x256xf32> to vector<2x1x256xf32>
    %117 = vector.shape_cast %113 : vector<2x256xf32> to vector<2x1x256xf32>
    %118 = vector.shape_cast %114 : vector<2x256xf32> to vector<2x1x256xf32>
    %119 = vector.shape_cast %115 : vector<2x256xf32> to vector<2x1x256xf32>
    %120 = tpu.concatenate %116, %117, %118, %119 in 1 : vector<2x1x256xf32>, vector<2x1x256xf32>, vector<2x1x256xf32>, vector<2x1x256xf32> -> vector<2x4x256xf32>
    %c0_14 = arith.constant 0 : index
    %c0_15 = arith.constant 0 : index
    %c0_16 = arith.constant 0 : index
    %121 = vector.load %arg7[%c0_14, %c0_15, %c0_16] : memref<2x4x256xf32, #tpu.memory_space<vmem>>, vector<2x4x256xf32>
    tpu.vector_store %arg7[%c0_14, %c0_15, %c0_16], %120 {strides = array<i32>} : memref<2x4x256xf32, #tpu.memory_space<vmem>>, vector<2x4x256xf32>,
    return
  }
  func.func @transform_0(%arg0: i32, %arg1: i32) -> (i32, i32, i32) {
    %c0_i32 = arith.constant 0 : i32
    %c0_i32_0 = arith.constant 0 : i32
    return %arg0, %c0_i32, %arg1 : i32, i32, i32
  }
  func.func @transform_1(%arg0: i32, %arg1: i32) -> (i32, i32, i32) {
    %c0_i32 = arith.constant 0 : i32
    %c0_i32_0 = arith.constant 0 : i32
    return %arg0, %c0_i32, %arg1 : i32, i32, i32
  }
  func.func @transform_2(%arg0: i32, %arg1: i32) -> (i32, i32, i32) {
    %c0_i32 = arith.constant 0 : i32
    %c0_i32_0 = arith.constant 0 : i32
    return %arg0, %c0_i32, %arg1 : i32, i32, i32
  }
  func.func @transform_3(%arg0: i32, %arg1: i32) -> (i32, i32, i32) {
    %c0_i32 = arith.constant 0 : i32
    %c0_i32_0 = arith.constant 0 : i32
    return %arg0, %c0_i32, %arg1 : i32, i32, i32
  }
  func.func @transform_4(%arg0: i32, %arg1: i32) -> (i32, i32, i32) {
    %c0_i32 = arith.constant 0 : i32
    %c0_i32_0 = arith.constant 0 : i32
    return %arg0, %c0_i32, %arg1 : i32, i32, i32
  }
  func.func @transform_5(%arg0: i32, %arg1: i32) -> (i32, i32, i32) {
    %c0_i32 = arith.constant 0 : i32
    %c0_i32_0 = arith.constant 0 : i32
    return %arg0, %c0_i32, %arg1 : i32, i32, i32
  }
}

</mosaic_0001>

<llo_original>
// kernel: weight_by_key_query.1
$region0: #{weight_by_key_query.1}
  #allocation0 [shape = 'u32[]', space=smem, size = 0x4, offset = 0x4, fixed_abs, tag = 'smem constant byte address 0x4 - core index']
  #allocation1 [shape = 'u32[72,128]{1,0:T(1,128)}', space=vmem, size = 0x9000, scoped, tag = 'internal scratch']
  %s0 = inlined_call_operand.vmem [shape: f32[2,4,256], index: 0, kind: input, shape index: {}]
  %s1 = inlined_call_operand.vmem [shape: f32[2,4,256], index: 1, kind: input, shape index: {}]
  %s2 = inlined_call_operand.vmem [shape: f32[2,4,256], index: 2, kind: input, shape index: {}]
  %s3 = inlined_call_operand.vmem [shape: f32[2,4,256], index: 3, kind: input, shape index: {}]
  %s4 = inlined_call_operand.vmem [shape: f32[2,4,256], index: 4, kind: input, shape index: {}]
  %s5 = inlined_call_operand.vmem [shape: f32[2,4,256], index: 5, kind: output, shape index: {}]
  %s6 = sld [smem:[#allocation0]]
  $region30: #{weight_by_key_query.1} parent=0
    _
  %s8 = ssub.s32 1, %s6
  %s9 = scalar_select 0, %s8, %s6
  // Predicated region
  $region2: #{weight_by_key_query.1} parent=0 // pred_check
    _
  $region3: #{weight_by_key_query.1} parent=0 // pred_check_branch
    %11 = sbr.rel (0) target = $region5
  $region4: #{weight_by_key_query.1} parent=0 // pred_region
    _
  $region5: #{weight_by_key_query.1} parent=0 // pred_fallthru
    _
  // Predicated region
  $region6: #{weight_by_key_query.1} parent=0 // pred_check
    _
  $region7: #{weight_by_key_query.1} parent=0 // pred_check_branch
    %13 = sbr.rel (0) target = $region9
  $region8: #{weight_by_key_query.1} parent=0 // pred_region
    _
  $region9: #{weight_by_key_query.1} parent=0 // pred_fallthru
    _
  // Predicated region
  $region10: #{weight_by_key_query.1} parent=0 // pred_check
    _
  $region11: #{weight_by_key_query.1} parent=0 // pred_check_branch
    %15 = sbr.rel (0) target = $region13
  $region12: #{weight_by_key_query.1} parent=0 // pred_region
    _
  $region13: #{weight_by_key_query.1} parent=0 // pred_fallthru
    _
  // Predicated region
  $region14: #{weight_by_key_query.1} parent=0 // pred_check
    _
  $region15: #{weight_by_key_query.1} parent=0 // pred_check_branch
    %17 = sbr.rel (0) target = $region17
  $region16: #{weight_by_key_query.1} parent=0 // pred_region
    _
  $region17: #{weight_by_key_query.1} parent=0 // pred_fallthru
    _
  // Predicated region
  $region18: #{weight_by_key_query.1} parent=0 // pred_check
    _
  $region19: #{weight_by_key_query.1} parent=0 // pred_check_branch
    %19 = sbr.rel (0) target = $region21
  $region20: #{weight_by_key_query.1} parent=0 // pred_region
    _
  $region21: #{weight_by_key_query.1} parent=0 // pred_fallthru
    _
  %v20 = vld [vmem:[%s0] sm:$0xff]
  %v21 = vld [vmem:[%s0 + $0x8] sm:$0xff]
  %v22 = vld [vmem:[%s1] sm:$0xff]
  %v23 = vld [vmem:[%s1 + $0x8] sm:$0xff]
  %v24 = vmul.f32 %v20, %v22
  %v25 = vmul.f32 %v21, %v23
  %v28 = vrot.slane %v24, 5
  %v29 = vrot.slane %v28, 4
  %v30 = vrot.slane %v25, 5
  %v31 = vrot.slane %v30, 4
  %v34 = vadd.f32 %v24, %v29
  %v35 = vadd.f32 %v25, %v31
  %v36 = vrot.slane %v24, 6
  %v37 = vrot.slane %v36, 4
  %v38 = vrot.slane %v25, 6
  %v39 = vrot.slane %v38, 4
  %v42 = vadd.f32 %v34, %v37
  %v43 = vadd.f32 %v35, %v39
  %v44 = vrot.slane %v24, 7
  %v45 = vrot.slane %v44, 4
  %v46 = vrot.slane %v25, 7
  %v47 = vrot.slane %v46, 4
  %v50 = vadd.f32 %v42, %v45
  %v51 = vadd.f32 %v43, %v47
  %v52 = vld [vmem:[%s2] sm:$0xff]
  %v53 = vld [vmem:[%s2 + $0x8] sm:$0xff]
  %v54 = vmul.f32 %v20, %v52
  %v55 = vmul.f32 %v21, %v53
  %v58 = vrot.slane %v54, 5
  %v59 = vrot.slane %v58, 4
  %v60 = vrot.slane %v55, 5
  %v61 = vrot.slane %v60, 4
  %v64 = vadd.f32 %v54, %v59
  %v65 = vadd.f32 %v55, %v61
  %v66 = vrot.slane %v54, 6
  %v67 = vrot.slane %v66, 4
  %v68 = vrot.slane %v55, 6
  %v69 = vrot.slane %v68, 4
  %v72 = vadd.f32 %v64, %v67
  %v73 = vadd.f32 %v65, %v69
  %v74 = vrot.slane %v54, 7
  %v75 = vrot.slane %v74, 4
  %v76 = vrot.slane %v55, 7
  %v77 = vrot.slane %v76, 4
  %v80 = vadd.f32 %v72, %v75
  %v81 = vadd.f32 %v73, %v77
  %v82 = vld [vmem:[%s3] sm:$0xff]
  %v83 = vld [vmem:[%s3 + $0x8] sm:$0xff]
  %v84 = vmul.f32 %v20, %v82
  %v85 = vmul.f32 %v21, %v83
  %v88 = vrot.slane %v84, 5
  %v89 = vrot.slane %v88, 4
  %v90 = vrot.slane %v85, 5
  %v91 = vrot.slane %v90, 4
  %v94 = vadd.f32 %v84, %v89
  %v95 = vadd.f32 %v85, %v91
  %v96 = vrot.slane %v84, 6
  %v97 = vrot.slane %v96, 4
  %v98 = vrot.slane %v85, 6
  %v99 = vrot.slane %v98, 4
  %v102 = vadd.f32 %v94, %v97
  %v103 = vadd.f32 %v95, %v99
  %v104 = vrot.slane %v84, 7
  %v105 = vrot.slane %v104, 4
  %v106 = vrot.slane %v85, 7
  %v107 = vrot.slane %v106, 4
  %v110 = vadd.f32 %v102, %v105
  %v111 = vadd.f32 %v103, %v107
  %v112 = vld [vmem:[%s4] sm:$0xff]
  %v113 = vld [vmem:[%s4 + $0x8] sm:$0xff]
  %v114 = vmul.f32 %v20, %v112
  %v115 = vmul.f32 %v21, %v113
  %v118 = vrot.slane %v114, 5
  %v119 = vrot.slane %v118, 4
  %v120 = vrot.slane %v115, 5
  %v121 = vrot.slane %v120, 4
  %v124 = vadd.f32 %v114, %v119
  %v125 = vadd.f32 %v115, %v121
  %v126 = vrot.slane %v114, 6
  %v127 = vrot.slane %v126, 4
  %v128 = vrot.slane %v115, 6
  %v129 = vrot.slane %v128, 4
  %v132 = vadd.f32 %v124, %v127
  %v133 = vadd.f32 %v125, %v129
  %v134 = vrot.slane %v114, 7
  %v135 = vrot.slane %v134, 4
  %v136 = vrot.slane %v115, 7
  %v137 = vrot.slane %v136, 4
  %v140 = vadd.f32 %v132, %v135
  %v141 = vadd.f32 %v133, %v137
  %v142 = vmax.f32 %v50, %v80
  %v143 = vmax.f32 %v51, %v81
  %v144 = vmax.f32 %v142, %v110
  %v145 = vmax.f32 %v143, %v111
  %v146 = vmax.f32 %v144, %v140
  %v147 = vmax.f32 %v145, %v141
  %v148 = vsub.f32 %v50, %v146
  %v149 = vsub.f32 %v51, %v147
  %v150 = vmul.f32 %v148, 1.442695
  %v151 = vpow.pop %v150
  %v152 = vmul.f32 %v149, 1.442695
  %v153 = vpow.pop %v152
  %v154 = vsub.f32 %v80, %v146
  %v155 = vsub.f32 %v81, %v147
  %v156 = vmul.f32 %v154, 1.442695
  %v157 = vpow.pop %v156
  %v158 = vmul.f32 %v155, 1.442695
  %v159 = vpow.pop %v158
  %v160 = vsub.f32 %v110, %v146
  %v161 = vsub.f32 %v111, %v147
  %v162 = vmul.f32 %v160, 1.442695
  %v163 = vpow.pop %v162
  %v164 = vmul.f32 %v161, 1.442695
  %v165 = vpow.pop %v164
  %v166 = vsub.f32 %v140, %v146
  %v167 = vsub.f32 %v141, %v147
  %v168 = vmul.f32 %v166, 1.442695
  %v169 = vpow.pop %v168
  %v170 = vmul.f32 %v167, 1.442695
  %v171 = vpow.pop %v170
  %v172 = vadd.f32 %v151, %v157
  %v173 = vadd.f32 %v153, %v159
  %v174 = vadd.f32 %v172, %v163
  %v175 = vadd.f32 %v173, %v165
  %v176 = vadd.f32 %v174, %v169
  %v177 = vadd.f32 %v175, %v171
  %v178 = vrcp.pop %v176
  %v179 = vmul.f32 %v176, %v178
  %v180 = vsub.f32 1.0, %v179
  %v181 = vmul.f32 %v178, %v180
  %v182 = vadd.f32 %v178, %v181
  %vm183 = vweird.f32 %v176
  %vm184 = vweird.f32 %v178
  %vm185 = vmor %vm183, %vm184
  %v186 = vsel %vm185, %v178, %v182
  %v187 = vand.u32 2147483647, %v176
  %vm188 = vcmp.eq.f32.partialorder %v187, 8.507059e+37
  %v189 = vand.u32 %v176, 2147483648
  %v190 = vor.u32 1.1754944e-38, %v189
  %v191 = vsel %vm188, %v190, %v186
  %v192 = vrcp.pop %v177
  %v193 = vmul.f32 %v177, %v192
  %v194 = vsub.f32 1.0, %v193
  %v195 = vmul.f32 %v192, %v194
  %v196 = vadd.f32 %v192, %v195
  %vm197 = vweird.f32 %v177
  %vm198 = vweird.f32 %v192
  %vm199 = vmor %vm197, %vm198
  %v200 = vsel %vm199, %v192, %v196
  %v201 = vand.u32 2147483647, %v177
  %vm202 = vcmp.eq.f32.partialorder %v201, 8.507059e+37
  %v203 = vand.u32 %v177, 2147483648
  %v204 = vor.u32 1.1754944e-38, %v203
  %v205 = vsel %vm202, %v204, %v200
  %v206 = vmul.f32 %v151, %v191
  %v207 = vmul.f32 %v153, %v205
  %v208 = vmul.f32 %v157, %v191
  %v209 = vmul.f32 %v159, %v205
  %v210 = vmul.f32 %v163, %v191
  %v211 = vmul.f32 %v165, %v205
  %v212 = vmul.f32 %v169, %v191
  %v213 = vmul.f32 %v171, %v205
  %v216 = vperm.slane %v206, 0
  %v217 = vperm.slane %v206, 4
  %v218 = vperm.slane %v207, 0
  %v219 = vperm.slane %v207, 4
  %v226 = vperm.slane %v208, 0
  %v227 = vperm.slane %v208, 4
  %v228 = vperm.slane %v209, 0
  %v229 = vperm.slane %v209, 4
  %v236 = vperm.slane %v210, 0
  %v237 = vperm.slane %v210, 4
  %v238 = vperm.slane %v211, 0
  %v239 = vperm.slane %v211, 4
  %v246 = vperm.slane %v212, 0
  %v247 = vperm.slane %v212, 4
  %v248 = vperm.slane %v213, 0
  %v249 = vperm.slane %v213, 4
  %vm254 = vcmask 1040384
  %v255 = vsel %vm254, %v216, %v226
  %v256 = vsel %vm254, %v217, %v227
  %v257 = vsel %vm254, %v218, %v228
  %v258 = vsel %vm254, %v219, %v229
  %vm259 = vcmask 1041408
  %v260 = vsel %vm259, %v255, %v236
  %v261 = vsel %vm259, %v256, %v237
  %v262 = vsel %vm259, %v257, %v238
  %v263 = vsel %vm259, %v258, %v239
  %vm264 = vcmask 1042432
  %v265 = vsel %vm264, %v260, %v246
  %v266 = vsel %vm264, %v261, %v247
  %v267 = vsel %vm264, %v262, %v248
  %v268 = vsel %vm264, %v263, %v249
  %v273 = vrot.slane %v266, 4
  %v274 = vrot.slane %v268, 4
  %vm275 = vcmask 1043456
  %v276 = vsel %vm275, %v265, %v273
  %v277 = vsel %vm275, %v267, %v274
  %280 = vst [vmem:[%s5] sm:$0xff] %v276
  %281 = vst [vmem:[%s5 + $0x8] sm:$0xff] %v277
  // Predicated region
  $region22: #{weight_by_key_query.1} parent=0 // pred_check
    _
  $region23: #{weight_by_key_query.1} parent=0 // pred_check_branch
    %283 = sbr.rel (0) target = $region25
  $region24: #{weight_by_key_query.1} parent=0 // pred_region
    _
  $region25: #{weight_by_key_query.1} parent=0 // pred_fallthru
    _
  // Predicated region
  $region26: #{weight_by_key_query.1} parent=0 // pred_check
    _
  $region27: #{weight_by_key_query.1} parent=0 // pred_check_branch
    %285 = sbr.rel (0) target = $region29
  $region28: #{weight_by_key_query.1} parent=0 // pred_region
    _
  $region29: #{weight_by_key_query.1} parent=0 // pred_fallthru
    _

</llo_original>
